<compile_context>
chip_gen: v5e
topology: v5e:2x2
jax: 0.10.0
libtpu: 0.0.40
codegen_flags: <defaults>
</compile_context>

<pallas_src>
import functools

import jax
import jax.numpy as jnp
from jax.experimental import pallas as pl
from jax.experimental.pallas import tpu as pltpu


def _round_up(x, m):
    return ((x + m - 1) // m) * m


def attn_decoder_kernel(
    idx_ref,        # SMEM (1,)  int32 token id
    emb_hbm_ref,    # ANY  (V, H) embedding table (stays in HBM)
    hid_ref,        # VMEM (1, H) previous hidden state
    enc_ref,        # VMEM (L, H) encoder outputs
    w_attn_ref,     # VMEM (2H, L)  attn.weight.T
    w_comb_ref,     # VMEM (2H, H)  attn_combine.weight.T
    w_ih_ref,       # VMEM (H, 3H)  gru.weight_ih.T  (gate order r,z,n on lanes)
    w_hh_ref,       # VMEM (H, 3H)  gru.weight_hh.T
    w_out_ref,      # VMEM (H, O)   out.weight.T
    bias_ref,       # VMEM (5, BW)  packed biases: [b_attn; b_comb; b_ih; b_hh; b_out]
    # output
    out_ref,        # VMEM (3, SLAB_W) packed: row0=logp, row1=new_hidden, row2=attn_w
    # scratch
    emb_vmem,       # VMEM (1, H)
    dma_sem,        # DMA semaphore
):
    f32 = jnp.float32
    H = hid_ref.shape[1]
    L = enc_ref.shape[0]
    O = w_out_ref.shape[1]
    V = emb_hbm_ref.shape[0]

    # ---- Embedding gather: DMA only the needed row HBM -> VMEM ----
    idx = idx_ref[0]
    idx = jnp.clip(idx, 0, V - 1)          # no runtime OOB check on refs; clamp
    cp = pltpu.make_async_copy(emb_hbm_ref.at[pl.ds(idx, 1), :], emb_vmem, dma_sem)
    cp.start()
    cp.wait()
    embedded = emb_vmem[...].astype(f32)   # (1, H)
    # TODO(synk): dropout(p=0.1) treated as eval-mode identity (no train-mode mask).
    hidden = hid_ref[...].astype(f32)      # (1, H)

    # ---- packed biases ----
    b_attn = bias_ref[pl.ds(0, 1), pl.ds(0, L)]        # (1, L)
    b_comb = bias_ref[pl.ds(1, 1), pl.ds(0, H)]        # (1, H)
    b_ih   = bias_ref[pl.ds(2, 1), pl.ds(0, 3 * H)]    # (1, 3H)
    b_hh   = bias_ref[pl.ds(3, 1), pl.ds(0, 3 * H)]    # (1, 3H)
    b_out  = bias_ref[pl.ds(4, 1), pl.ds(0, O)]        # (1, O)

    # ---- attention weights: softmax(cat([emb, hid]) @ W_attn + b) ----
    eh = jnp.concatenate([embedded, hidden], axis=-1)                      # (1, 2H)
    attn_logits = jnp.dot(eh, w_attn_ref[...], preferred_element_type=f32) + b_attn
    m = jnp.max(attn_logits, axis=-1, keepdims=True)
    e = jnp.exp(attn_logits - m)
    attn_w = e * pl.reciprocal(jnp.sum(e, axis=-1, keepdims=True), approx=True)

    # ---- attn_applied = attn_w @ encoder_outputs ----
    attn_applied = jnp.dot(attn_w, enc_ref[...].astype(f32),
                           preferred_element_type=f32)                     # (1, H)

    # ---- attn_combine + relu ----
    ea = jnp.concatenate([embedded, attn_applied], axis=-1)                # (1, 2H)
    x = jnp.maximum(
        jnp.dot(ea, w_comb_ref[...], preferred_element_type=f32) + b_comb, 0.0)

    # ---- GRU cell (fused: 2 matmuls, gate order r, z, n) ----
    gi = jnp.dot(x, w_ih_ref[...], preferred_element_type=f32) + b_ih      # (1, 3H)
    gh = jnp.dot(hidden, w_hh_ref[...], preferred_element_type=f32) + b_hh # (1, 3H)
    r = jax.nn.sigmoid(gi[:, 0:H] + gh[:, 0:H])
    z = jax.nn.sigmoid(gi[:, H:2 * H] + gh[:, H:2 * H])
    n = jnp.tanh(gi[:, 2 * H:3 * H] + r * gh[:, 2 * H:3 * H])
    h_new = (1.0 - z) * n + z * hidden                                     # (1, H)

    # ---- output projection + log_softmax ----
    logits = jnp.dot(h_new, w_out_ref[...], preferred_element_type=f32) + b_out
    lm = jnp.max(logits, axis=-1, keepdims=True)
    shifted = logits - lm
    lse = jnp.log(jnp.sum(jnp.exp(shifted), axis=-1, keepdims=True))
    logp = shifted - lse                                                   # (1, O)

    # ---- single lane-dense output slab (one writeback DMA) ----
    out_ref[...] = jnp.zeros_like(out_ref)
    out_ref[pl.ds(0, 1), pl.ds(0, O)] = logp.astype(out_ref.dtype)
    out_ref[pl.ds(1, 1), pl.ds(0, H)] = h_new.astype(out_ref.dtype)
    out_ref[pl.ds(2, 1), pl.ds(0, L)] = attn_w.astype(out_ref.dtype)


def pack_params(params):
    """One-time weight packing (do this OUTSIDE the per-token decode loop)."""
    H = params["comb_w"].shape[0]
    L = params["attn_b"].shape[0]
    O = params["out_w"].shape[0]
    bw = _round_up(max(L, H, 3 * H, O), 128)

    biases = jnp.zeros((5, bw), jnp.float32)
    biases = biases.at[0, :L].set(params["attn_b"].astype(jnp.float32))
    biases = biases.at[1, :H].set(params["comb_b"].astype(jnp.float32))
    biases = biases.at[2, :3 * H].set(params["b_ih"].astype(jnp.float32))
    biases = biases.at[3, :3 * H].set(params["b_hh"].astype(jnp.float32))
    biases = biases.at[4, :O].set(params["out_b"].astype(jnp.float32))

    packed = {
        "embedding": jnp.asarray(params["embedding"], jnp.float32),  # (V, H), kept in HBM
        "w_attn_t":  jnp.asarray(params["attn_w"].T, jnp.float32),   # (2H, L)
        "w_comb_t":  jnp.asarray(params["comb_w"].T, jnp.float32),   # (2H, H)
        "w_ih_t":    jnp.asarray(params["w_ih"].T, jnp.float32),     # (H, 3H)
        "w_hh_t":    jnp.asarray(params["w_hh"].T, jnp.float32),     # (H, 3H)
        "w_out_t":   jnp.asarray(params["out_w"].T, jnp.float32),    # (H, O)
        "biases":    biases,                                         # (5, bw)
    }
    return jax.device_put(packed)


@jax.jit
def attn_decoder_forward(packed, token_id, hidden, encoder_outputs):
    """token_id: (1,) int32; hidden: (1,1,H); encoder_outputs: (L,H).
    Returns (log_probs (1,O), hidden (1,1,H), attn_weights (1,L))."""
    H = packed["w_comb_t"].shape[1]
    L = packed["w_attn_t"].shape[1]
    O = packed["w_out_t"].shape[1]
    slab_w = _round_up(max(O, H, L), 128)

    hid2d = hidden.reshape(1, H)

    vmem = pl.BlockSpec(memory_space=pltpu.MemorySpace.VMEM)
    smem = pl.BlockSpec(memory_space=pltpu.MemorySpace.SMEM)
    hbm = pl.BlockSpec(memory_space=pl.ANY)   # embedding table stays in HBM

    slab = pl.pallas_call(
        attn_decoder_kernel,
        out_shape=jax.ShapeDtypeStruct((3, slab_w), jnp.float32),
        in_specs=[smem, hbm, vmem, vmem, vmem, vmem, vmem, vmem, vmem, vmem],
        out_specs=vmem,
        scratch_shapes=[
            pltpu.VMEM((1, H), packed["embedding"].dtype),
            pltpu.SemaphoreType.DMA,
        ],
    )(
        token_id.astype(jnp.int32),
        packed["embedding"],
        hid2d,
        encoder_outputs.astype(jnp.float32),
        packed["w_attn_t"], packed["w_comb_t"],
        packed["w_ih_t"], packed["w_hh_t"], packed["w_out_t"],
        packed["biases"],
    )

    logp = slab[0:1, 0:O]
    new_hid = slab[1:2, 0:H].reshape(1, 1, H)
    attn_w = slab[2:3, 0:L]
    return logp, new_hid, attn_w


def _reference_forward(params, token_id, hidden, encoder_outputs):
    """Pure-JAX reference mirroring the PyTorch forward (eval mode)."""
    H = hidden.shape[-1]
    emb = params["embedding"][token_id[0]].reshape(1, H)
    hid = hidden.reshape(1, H)
    attn_in = jnp.concatenate([emb, hid], axis=1)
    attn_logits = attn_in @ params["attn_w"].T + params["attn_b"]
    attn_w = jax.nn.softmax(attn_logits, axis=1)
    attn_applied = attn_w @ encoder_outputs
    comb_in = jnp.concatenate([emb, attn_applied], axis=1)
    x = jax.nn.relu(comb_in @ params["comb_w"].T + params["comb_b"])
    w_ih, w_hh, b_ih, b_hh = (params["w_ih"], params["w_hh"],
                              params["b_ih"], params["b_hh"])
    gi = x @ w_ih.T + b_ih
    gh = hid @ w_hh.T + b_hh
    r = jax.nn.sigmoid(gi[:, :H] + gh[:, :H])
    z = jax.nn.sigmoid(gi[:, H:2 * H] + gh[:, H:2 * H])
    n = jnp.tanh(gi[:, 2 * H:] + r * gh[:, 2 * H:])
    h_new = (1.0 - z) * n + z * hid
    logits = h_new @ params["out_w"].T + params["out_b"]
    logp = jax.nn.log_softmax(logits, axis=1)
    return logp, h_new.reshape(1, 1, H), attn_w


if __name__ == "__main__":
    H, L, O, V = 32, 8, 16, 20   # hidden_size, max_length, output_size, vocab
    key = jax.random.PRNGKey(0)
    ks = jax.random.split(key, 12)
    s = 0.1
    params = {
        "embedding": jax.random.normal(ks[0], (V, H), jnp.float32) * s,
        "attn_w":    jax.random.normal(ks[1], (L, 2 * H), jnp.float32) * s,
        "attn_b":    jax.random.normal(ks[2], (L,), jnp.float32) * s,
        "comb_w":    jax.random.normal(ks[3], (H, 2 * H), jnp.float32) * s,
        "comb_b":    jax.random.normal(ks[4], (H,), jnp.float32) * s,
        "w_ih":      jax.random.normal(ks[5], (3 * H, H), jnp.float32) * s,
        "w_hh":      jax.random.normal(ks[6], (3 * H, H), jnp.float32) * s,
        "b_ih":      jax.random.normal(ks[7], (3 * H,), jnp.float32) * s,
        "b_hh":      jax.random.normal(ks[8], (3 * H,), jnp.float32) * s,
        "out_w":     jax.random.normal(ks[9], (O, H), jnp.float32) * s,
        "out_b":     jax.random.normal(ks[10], (O,), jnp.float32) * s,
    }
    token = jnp.array([3], dtype=jnp.int32)
    hidden0 = jnp.zeros((1, 1, H), jnp.float32)
    encoder_outputs = jax.random.normal(ks[11], (L, H), jnp.float32)

    packed = pack_params(params)            # one-time, outside the decode step
    jax.block_until_ready(packed)

    logp, hid, attnw = attn_decoder_forward(packed, token, hidden0, encoder_outputs)
    jax.block_until_ready((logp, hid, attnw))

    rlogp, rhid, rattnw = _reference_forward(params, token, hidden0, encoder_outputs)
    assert jnp.allclose(logp, rlogp, atol=1e-3, rtol=1e-3)
    assert jnp.allclose(hid, rhid, atol=1e-3, rtol=1e-3)
    assert jnp.allclose(attnw, rattnw, atol=1e-3, rtol=1e-3)

    print("KERNEL_OK")
</pallas_src>

<mosaic_0001>
module attributes {stable_mosaic.version = 11 : i64} {
  func.func @attn_decoder_kernel(%arg0: memref<1xi32, #tpu.memory_space<smem>>, %arg1: memref<20x32xf32, #tpu.memory_space<any>>, %arg2: memref<1x32xf32, #tpu.memory_space<vmem>>, %arg3: memref<8x32xf32, #tpu.memory_space<vmem>>, %arg4: memref<64x8xf32, #tpu.memory_space<vmem>>, %arg5: memref<64x32xf32, #tpu.memory_space<vmem>>, %arg6: memref<32x96xf32, #tpu.memory_space<vmem>>, %arg7: memref<32x96xf32, #tpu.memory_space<vmem>>, %arg8: memref<32x16xf32, #tpu.memory_space<vmem>>, %arg9: memref<5x128xf32, #tpu.memory_space<vmem>>, %arg10: memref<3x128xf32, #tpu.memory_space<vmem>>, %arg11: memref<1x32xf32, #tpu.memory_space<vmem>>, %arg12: memref<!tpu.dma_semaphore, #tpu.memory_space<semaphore_mem>>) attributes {dimension_semantics = [], scalar_prefetch = 0 : i64, scratch_operands = 2 : i64, tpu.core_type = #tpu.core_type<tc>} {
    %c0 = arith.constant 0 : index
    %0 = memref.load %arg0[%c0] : memref<1xi32, #tpu.memory_space<smem>>
    %c0_i32 = arith.constant 0 : i32
    %c19_i32 = arith.constant 19 : i32
    %1 = arith.maxsi %c0_i32, %0 : i32
    %2 = arith.minsi %c19_i32, %1 : i32
    %c0_i32_0 = arith.constant 0 : i32
    %3 = tpu.memref_slice %arg1[%2, %c0_i32_0] : memref<20x32xf32, #tpu.memory_space<any>> -> memref<1x32xf32, #tpu.memory_space<any>>
    tpu.enqueue_dma source(%3 : memref<1x32xf32, #tpu.memory_space<any>>) target(%arg11 : memref<1x32xf32, #tpu.memory_space<vmem>>) target_semaphore(%arg12 : memref<!tpu.dma_semaphore, #tpu.memory_space<semaphore_mem>>)
    %c0_i32_1 = arith.constant 0 : i32
    %4 = tpu.memref_slice %arg1[%2, %c0_i32_1] : memref<20x32xf32, #tpu.memory_space<any>> -> memref<1x32xf32, #tpu.memory_space<any>>
    tpu.wait_dma2 semaphore(%arg12 : memref<!tpu.dma_semaphore, #tpu.memory_space<semaphore_mem>>) src(%4 : memref<1x32xf32, #tpu.memory_space<any>>) dst(%arg11 : memref<1x32xf32, #tpu.memory_space<vmem>>)
    %c0_2 = arith.constant 0 : index
    %c0_3 = arith.constant 0 : index
    %5 = vector.load %arg11[%c0_2, %c0_3] : memref<1x32xf32, #tpu.memory_space<vmem>>, vector<1x32xf32>
    %c0_4 = arith.constant 0 : index
    %c0_5 = arith.constant 0 : index
    %6 = vector.load %arg2[%c0_4, %c0_5] : memref<1x32xf32, #tpu.memory_space<vmem>>, vector<1x32xf32>
    %c0_6 = arith.constant 0 : index
    %c0_7 = arith.constant 0 : index
    %7 = vector.load %arg9[%c0_6, %c0_7] : memref<5x128xf32, #tpu.memory_space<vmem>>, vector<1x8xf32>
    %c1 = arith.constant 1 : index
    %c0_8 = arith.constant 0 : index
    %8 = vector.load %arg9[%c1, %c0_8] : memref<5x128xf32, #tpu.memory_space<vmem>>, vector<1x32xf32>
    %c2 = arith.constant 2 : index
    %c0_9 = arith.constant 0 : index
    %9 = vector.load %arg9[%c2, %c0_9] : memref<5x128xf32, #tpu.memory_space<vmem>>, vector<1x96xf32>
    %c3 = arith.constant 3 : index
    %c0_10 = arith.constant 0 : index
    %10 = vector.load %arg9[%c3, %c0_10] : memref<5x128xf32, #tpu.memory_space<vmem>>, vector<1x96xf32>
    %c4 = arith.constant 4 : index
    %c0_11 = arith.constant 0 : index
    %11 = vector.load %arg9[%c4, %c0_11] : memref<5x128xf32, #tpu.memory_space<vmem>>, vector<1x16xf32>
    %12 = tpu.concatenate %5, %6 in 1 : vector<1x32xf32>, vector<1x32xf32> -> vector<1x64xf32>
    %c0_12 = arith.constant 0 : index
    %c0_13 = arith.constant 0 : index
    %13 = vector.load %arg4[%c0_12, %c0_13] : memref<64x8xf32, #tpu.memory_space<vmem>>, vector<64x8xf32>
    %cst = arith.constant dense<0.000000e+00> : vector<1x8xf32>
    %14 = tpu.matmul %12, %13, %cst {dimension_numbers = #tpu.dot_dimension_numbers<[1], [0], [0], [1], [0, 0, 1, 1], [], []>} : vector<1x64xf32>, vector<64x8xf32>, vector<1x8xf32> -> vector<1x8xf32>
    %15 = arith.addf %14, %7 : vector<1x8xf32>
    %cst_14 = arith.constant dense<0xFF800000> : vector<1xf32>
    %16 = vector.multi_reduction <maximumf>, %15, %cst_14 [1] : vector<1x8xf32> to vector<1xf32>
    %17 = vector.shape_cast %16 : vector<1xf32> to vector<1x1xf32>
    %18 = vector.broadcast %17 : vector<1x1xf32> to vector<1x8xf32>
    %19 = arith.subf %15, %18 : vector<1x8xf32>
    %20 = math.exp %19 : vector<1x8xf32>
    %cst_15 = arith.constant dense<0.000000e+00> : vector<1xf32>
    %21 = vector.multi_reduction <add>, %20, %cst_15 [1] : vector<1x8xf32> to vector<1xf32>
    %22 = vector.shape_cast %21 : vector<1xf32> to vector<1x1xf32>
    %23 = tpu.reciprocal %22 {approx = true} : vector<1x1xf32> -> vector<1x1xf32>
    %24 = vector.broadcast %23 : vector<1x1xf32> to vector<1x8xf32>
    %25 = arith.mulf %20, %24 : vector<1x8xf32>
    %c0_16 = arith.constant 0 : index
    %c0_17 = arith.constant 0 : index
    %26 = vector.load %arg3[%c0_16, %c0_17] : memref<8x32xf32, #tpu.memory_space<vmem>>, vector<8x32xf32>
    %cst_18 = arith.constant dense<0.000000e+00> : vector<1x32xf32>
    %27 = tpu.matmul %25, %26, %cst_18 {dimension_numbers = #tpu.dot_dimension_numbers<[1], [0], [0], [1], [0, 0, 1, 1], [], []>} : vector<1x8xf32>, vector<8x32xf32>, vector<1x32xf32> -> vector<1x32xf32>
    %28 = tpu.concatenate %5, %27 in 1 : vector<1x32xf32>, vector<1x32xf32> -> vector<1x64xf32>
    %c0_19 = arith.constant 0 : index
    %c0_20 = arith.constant 0 : index
    %29 = vector.load %arg5[%c0_19, %c0_20] : memref<64x32xf32, #tpu.memory_space<vmem>>, vector<64x32xf32>
    %cst_21 = arith.constant dense<0.000000e+00> : vector<1x32xf32>
    %30 = tpu.matmul %28, %29, %cst_21 {dimension_numbers = #tpu.dot_dimension_numbers<[1], [0], [0], [1], [0, 0, 1, 1], [], []>} : vector<1x64xf32>, vector<64x32xf32>, vector<1x32xf32> -> vector<1x32xf32>
    %31 = arith.addf %30, %8 : vector<1x32xf32>
    %cst_22 = arith.constant 0.000000e+00 : f32
    %32 = vector.broadcast %cst_22 : f32 to vector<1x32xf32>
    %33 = arith.maximumf %31, %32 : vector<1x32xf32>
    %c0_23 = arith.constant 0 : index
    %c0_24 = arith.constant 0 : index
    %34 = vector.load %arg6[%c0_23, %c0_24] : memref<32x96xf32, #tpu.memory_space<vmem>>, vector<32x96xf32>
    %cst_25 = arith.constant dense<0.000000e+00> : vector<1x96xf32>
    %35 = tpu.matmul %33, %34, %cst_25 {dimension_numbers = #tpu.dot_dimension_numbers<[1], [0], [0], [1], [0, 0, 1, 1], [], []>} : vector<1x32xf32>, vector<32x96xf32>, vector<1x96xf32> -> vector<1x96xf32>
    %36 = arith.addf %35, %9 : vector<1x96xf32>
    %c0_26 = arith.constant 0 : index
    %c0_27 = arith.constant 0 : index
    %37 = vector.load %arg7[%c0_26, %c0_27] : memref<32x96xf32, #tpu.memory_space<vmem>>, vector<32x96xf32>
    %cst_28 = arith.constant dense<0.000000e+00> : vector<1x96xf32>
    %38 = tpu.matmul %6, %37, %cst_28 {dimension_numbers = #tpu.dot_dimension_numbers<[1], [0], [0], [1], [0, 0, 1, 1], [], []>} : vector<1x32xf32>, vector<32x96xf32>, vector<1x96xf32> -> vector<1x96xf32>
    %39 = arith.addf %38, %10 : vector<1x96xf32>
    %40 = vector.extract_strided_slice %36 {offsets = [0, 0], sizes = [1, 32], strides = [1, 1]} : vector<1x96xf32> to vector<1x32xf32>
    %41 = vector.extract_strided_slice %39 {offsets = [0, 0], sizes = [1, 32], strides = [1, 1]} : vector<1x96xf32> to vector<1x32xf32>
    %42 = arith.addf %40, %41 : vector<1x32xf32>
    %43 = arith.negf %42 : vector<1x32xf32>
    %44 = math.exp %43 : vector<1x32xf32>
    %cst_29 = arith.constant 1.000000e+00 : f32
    %45 = vector.broadcast %cst_29 : f32 to vector<1x32xf32>
    %46 = arith.addf %45, %44 : vector<1x32xf32>
    %47 = arith.divf %45, %46 : vector<1x32xf32>
    %48 = vector.extract_strided_slice %36 {offsets = [0, 32], sizes = [1, 32], strides = [1, 1]} : vector<1x96xf32> to vector<1x32xf32>
    %49 = vector.extract_strided_slice %39 {offsets = [0, 32], sizes = [1, 32], strides = [1, 1]} : vector<1x96xf32> to vector<1x32xf32>
    %50 = arith.addf %48, %49 : vector<1x32xf32>
    %51 = arith.negf %50 : vector<1x32xf32>
    %52 = math.exp %51 : vector<1x32xf32>
    %cst_30 = arith.constant 1.000000e+00 : f32
    %53 = vector.broadcast %cst_30 : f32 to vector<1x32xf32>
    %54 = arith.addf %53, %52 : vector<1x32xf32>
    %55 = arith.divf %53, %54 : vector<1x32xf32>
    %56 = vector.extract_strided_slice %36 {offsets = [0, 64], sizes = [1, 32], strides = [1, 1]} : vector<1x96xf32> to vector<1x32xf32>
    %57 = vector.extract_strided_slice %39 {offsets = [0, 64], sizes = [1, 32], strides = [1, 1]} : vector<1x96xf32> to vector<1x32xf32>
    %58 = arith.mulf %47, %57 : vector<1x32xf32>
    %59 = arith.addf %56, %58 : vector<1x32xf32>
    %60 = math.tanh %59 : vector<1x32xf32>
    %cst_31 = arith.constant 1.000000e+00 : f32
    %61 = vector.broadcast %cst_31 : f32 to vector<1x32xf32>
    %62 = arith.subf %61, %55 : vector<1x32xf32>
    %63 = arith.mulf %62, %60 : vector<1x32xf32>
    %64 = arith.mulf %55, %6 : vector<1x32xf32>
    %65 = arith.addf %63, %64 : vector<1x32xf32>
    %c0_32 = arith.constant 0 : index
    %c0_33 = arith.constant 0 : index
    %66 = vector.load %arg8[%c0_32, %c0_33] : memref<32x16xf32, #tpu.memory_space<vmem>>, vector<32x16xf32>
    %cst_34 = arith.constant dense<0.000000e+00> : vector<1x16xf32>
    %67 = tpu.matmul %65, %66, %cst_34 {dimension_numbers = #tpu.dot_dimension_numbers<[1], [0], [0], [1], [0, 0, 1, 1], [], []>} : vector<1x32xf32>, vector<32x16xf32>, vector<1x16xf32> -> vector<1x16xf32>
    %68 = arith.addf %67, %11 : vector<1x16xf32>
    %cst_35 = arith.constant dense<0xFF800000> : vector<1xf32>
    %69 = vector.multi_reduction <maximumf>, %68, %cst_35 [1] : vector<1x16xf32> to vector<1xf32>
    %70 = vector.shape_cast %69 : vector<1xf32> to vector<1x1xf32>
    %71 = vector.broadcast %70 : vector<1x1xf32> to vector<1x16xf32>
    %72 = arith.subf %68, %71 : vector<1x16xf32>
    %73 = math.exp %72 : vector<1x16xf32>
    %cst_36 = arith.constant dense<0.000000e+00> : vector<1xf32>
    %74 = vector.multi_reduction <add>, %73, %cst_36 [1] : vector<1x16xf32> to vector<1xf32>
    %75 = vector.shape_cast %74 : vector<1xf32> to vector<1x1xf32>
    %76 = math.log %75 : vector<1x1xf32>
    %77 = vector.broadcast %76 : vector<1x1xf32> to vector<1x16xf32>
    %78 = arith.subf %72, %77 : vector<1x16xf32>
    %cst_37 = arith.constant 0.000000e+00 : f32
    %79 = vector.broadcast %cst_37 : f32 to vector<3x128xf32>
    %c0_38 = arith.constant 0 : index
    %c0_39 = arith.constant 0 : index
    %80 = vector.load %arg10[%c0_38, %c0_39] : memref<3x128xf32, #tpu.memory_space<vmem>>, vector<3x128xf32>
    tpu.vector_store %arg10[%c0_38, %c0_39], %79 {strides = array<i32>} : memref<3x128xf32, #tpu.memory_space<vmem>>, vector<3x128xf32>,
    %c0_40 = arith.constant 0 : index
    %c0_41 = arith.constant 0 : index
    %81 = vector.load %arg10[%c0_40, %c0_41] : memref<3x128xf32, #tpu.memory_space<vmem>>, vector<1x16xf32>
    tpu.vector_store %arg10[%c0_40, %c0_41], %78 {strides = array<i32>} : memref<3x128xf32, #tpu.memory_space<vmem>>, vector<1x16xf32>,
    %c1_42 = arith.constant 1 : index
    %c0_43 = arith.constant 0 : index
    %82 = vector.load %arg10[%c1_42, %c0_43] : memref<3x128xf32, #tpu.memory_space<vmem>>, vector<1x32xf32>
    tpu.vector_store %arg10[%c1_42, %c0_43], %65 {strides = array<i32>} : memref<3x128xf32, #tpu.memory_space<vmem>>, vector<1x32xf32>,
    %c2_44 = arith.constant 2 : index
    %c0_45 = arith.constant 0 : index
    %83 = vector.load %arg10[%c2_44, %c0_45] : memref<3x128xf32, #tpu.memory_space<vmem>>, vector<1x8xf32>
    tpu.vector_store %arg10[%c2_44, %c0_45], %25 {strides = array<i32>} : memref<3x128xf32, #tpu.memory_space<vmem>>, vector<1x8xf32>,
    return
  }
}

</mosaic_0001>

<llo_original>
// kernel: attn_decoder_forward.1
$region0: #{attn_decoder_forward.1}
  #allocation0 [shape = 'u32[]', space=smem, size = 0x4, offset = 0x4, fixed_abs, tag = 'smem constant byte address 0x4 - core index']
  #allocation1 [shape = 'u32[72,128]{1,0:T(1,128)}', space=vmem, size = 0x9000, scoped, tag = 'internal scratch']
  #allocation2 [shape = 'f32[1,32]{1,0:T(1,128)}', space=vmem, size = 0x200, scoped, tag = 'scratch operand']
  #allocation3 [shape = 's32[1]{0}', space=sflag, size = 0x4, scoped, tag = 'scratch operand']
  #allocation4 [shape = 's32[1]{0:T(128)S(6)}', space=smem, size = 0x200, scoped, tag = 'scoped memory for attn_decoder_forward.1']
  #allocation5 [shape = 's32[]', space=sflag, size = 0x4, offset = 0, fixed_abs, tag = 'sflag constant byte address 0x0 - dummy sync flag']
  %s0 = inlined_call_operand.<no memory space> [shape: s32[1], index: 0, kind: input, shape index: {}]
  %s1 = inlined_call_operand.vmem [shape: f32[20,32], index: 1, kind: input, shape index: {}]
  %s2 = inlined_call_operand.vmem [shape: f32[1,32], index: 2, kind: input, shape index: {}]
  %s3 = inlined_call_operand.vmem [shape: f32[8,32], index: 3, kind: input, shape index: {}]
  %s4 = inlined_call_operand.vmem [shape: f32[64,8], index: 4, kind: input, shape index: {}]
  %s5 = inlined_call_operand.vmem [shape: f32[64,32], index: 5, kind: input, shape index: {}]
  %s6 = inlined_call_operand.vmem [shape: f32[32,96], index: 6, kind: input, shape index: {}]
  %s7 = inlined_call_operand.vmem [shape: f32[32,96], index: 7, kind: input, shape index: {}]
  %s8 = inlined_call_operand.vmem [shape: f32[32,16], index: 8, kind: input, shape index: {}]
  %s9 = inlined_call_operand.vmem [shape: f32[5,128], index: 9, kind: input, shape index: {}]
  %s10 = inlined_call_operand.vmem [shape: f32[3,128], index: 10, kind: output, shape index: {}]
  %s11 = sld [smem:[#allocation0]]
  $region76: #{attn_decoder_forward.1} parent=0
    _
  %s13 = ssub.s32 1, %s11
  %s14 = scalar_select 0, %s13, %s11
  %15 = sst [smem:[#allocation4]] %s0
  // Predicated region
  $region2: #{attn_decoder_forward.1} parent=0 // pred_check
    _
  $region3: #{attn_decoder_forward.1} parent=0 // pred_check_branch
    %17 = sbr.rel (0) target = $region5
  $region4: #{attn_decoder_forward.1} parent=0 // pred_region
    _
  $region5: #{attn_decoder_forward.1} parent=0 // pred_fallthru
    _
  // Predicated region
  $region6: #{attn_decoder_forward.1} parent=0 // pred_check
    _
  $region7: #{attn_decoder_forward.1} parent=0 // pred_check_branch
    %19 = sbr.rel (0) target = $region9
  $region8: #{attn_decoder_forward.1} parent=0 // pred_region
    _
  $region9: #{attn_decoder_forward.1} parent=0 // pred_fallthru
    _
  // Predicated region
  $region10: #{attn_decoder_forward.1} parent=0 // pred_check
    _
  $region11: #{attn_decoder_forward.1} parent=0 // pred_check_branch
    %21 = sbr.rel (0) target = $region13
  $region12: #{attn_decoder_forward.1} parent=0 // pred_region
    _
  $region13: #{attn_decoder_forward.1} parent=0 // pred_fallthru
    _
  // Predicated region
  $region14: #{attn_decoder_forward.1} parent=0 // pred_check
    _
  $region15: #{attn_decoder_forward.1} parent=0 // pred_check_branch
    %23 = sbr.rel (0) target = $region17
  $region16: #{attn_decoder_forward.1} parent=0 // pred_region
    _
  $region17: #{attn_decoder_forward.1} parent=0 // pred_fallthru
    _
  // Predicated region
  $region18: #{attn_decoder_forward.1} parent=0 // pred_check
    _
  $region19: #{attn_decoder_forward.1} parent=0 // pred_check_branch
    %25 = sbr.rel (0) target = $region21
  $region20: #{attn_decoder_forward.1} parent=0 // pred_region
    _
  $region21: #{attn_decoder_forward.1} parent=0 // pred_fallthru
    _
  // Predicated region
  $region22: #{attn_decoder_forward.1} parent=0 // pred_check
    _
  $region23: #{attn_decoder_forward.1} parent=0 // pred_check_branch
    %27 = sbr.rel (0) target = $region25
  $region24: #{attn_decoder_forward.1} parent=0 // pred_region
    _
  $region25: #{attn_decoder_forward.1} parent=0 // pred_fallthru
    _
  // Predicated region
  $region26: #{attn_decoder_forward.1} parent=0 // pred_check
    _
  $region27: #{attn_decoder_forward.1} parent=0 // pred_check_branch
    %29 = sbr.rel (0) target = $region29
  $region28: #{attn_decoder_forward.1} parent=0 // pred_region
    _
  $region29: #{attn_decoder_forward.1} parent=0 // pred_fallthru
    _
  // Predicated region
  $region30: #{attn_decoder_forward.1} parent=0 // pred_check
    _
  $region31: #{attn_decoder_forward.1} parent=0 // pred_check_branch
    %31 = sbr.rel (0) target = $region33
  $region32: #{attn_decoder_forward.1} parent=0 // pred_region
    _
  $region33: #{attn_decoder_forward.1} parent=0 // pred_fallthru
    _
  // Predicated region
  $region34: #{attn_decoder_forward.1} parent=0 // pred_check
    _
  $region35: #{attn_decoder_forward.1} parent=0 // pred_check_branch
    %33 = sbr.rel (0) target = $region37
  $region36: #{attn_decoder_forward.1} parent=0 // pred_region
    _
  $region37: #{attn_decoder_forward.1} parent=0 // pred_fallthru
    _
  %s34 = sld [smem:[#allocation4]]
  %p35 = scmp.gt.s32.totalorder %s34, 0
  %s36 = scalar_select %p35, %s34, 0
  %p37 = scmp.lt.s32.totalorder %s36, 19
  %s38 = scalar_select %p37, %s36, 19
  %s39 = scalar_lea.vmem %s1, %s38
  // Predicated region
  $region38: #{attn_decoder_forward.1} parent=0 // pred_check
    _
  $region39: #{attn_decoder_forward.1} parent=0 // pred_check_branch
    %41 = sbr.rel target = $region41
  $region40: #{attn_decoder_forward.1} parent=0 // pred_region
    // Predicated region
    $region53: #{attn_decoder_forward.1} parent=40 // pred_check
      _
    $region54: #{attn_decoder_forward.1} parent=40 // pred_check_branch
      %57 = sbr.rel (0) target = $region56
    $region55: #{attn_decoder_forward.1} parent=40 // pred_region
      %s59 = ssub.s32 2, 1
      loop: start=0, step=1, limit=1
      $region57: #{attn_decoder_forward.1} parent=55 // loop_pre_header
        _
      $region58: #{attn_decoder_forward.1} parent=55 // loop_header
        %s61 = sphi 0, %s65
        %p62 = scmp.ge.s32.totalorder %s61, 1
        %s66 = sphi %s39, %s39
        %s67 = sphi [#allocation2], [#allocation2]
      $region59: #{attn_decoder_forward.1} parent=55 // loop_header_branch
        %64 = sbr.rel (%p62) target = $region63
      $region60: #{attn_decoder_forward.1} parent=55 // loop_body
        %v68 = vld [vmem:[%s66] sm:%s59]
        %69 = vst [vmem:[%s67] sm:%s59] %v68
      $region61: #{attn_decoder_forward.1} parent=55 // loop_footer
        %s65 = sadd.s32 1, %s61
      $region62: #{attn_decoder_forward.1} parent=55 // loop_footer_branch
        %60 = sbr.rel target = $region58
      $region63: #{attn_decoder_forward.1} parent=55 // loop_exit
        _
    $region56: #{attn_decoder_forward.1} parent=40 // pred_fallthru
      _
  $region41: #{attn_decoder_forward.1} parent=0 // pred_fallthru
    _
  // Predicated region
  $region42: #{attn_decoder_forward.1} parent=0 // pred_check
    _
  $region43: #{attn_decoder_forward.1} parent=0 // pred_check_branch
    %43 = sbr.rel (0) target = $region45
  $region44: #{attn_decoder_forward.1} parent=0 // pred_region
    %s45 = ssub.s32 2, 1
    loop: start=0, step=1, limit=1
    $region46: #{attn_decoder_forward.1} parent=44 // loop_pre_header
      _
    $region47: #{attn_decoder_forward.1} parent=44 // loop_header
      %s47 = sphi 0, %s51
      %p48 = scmp.ge.s32.totalorder %s47, 1
      %s52 = sphi %s39, %s39
      %s53 = sphi [#allocation2], [#allocation2]
    $region48: #{attn_decoder_forward.1} parent=44 // loop_header_branch
      %50 = sbr.rel (%p48) target = $region52
    $region49: #{attn_decoder_forward.1} parent=44 // loop_body
      %v54 = vld [vmem:[%s52] sm:%s45]
      %55 = vst [vmem:[%s53] sm:%s45] %v54
    $region50: #{attn_decoder_forward.1} parent=44 // loop_footer
      %s51 = sadd.s32 1, %s47
    $region51: #{attn_decoder_forward.1} parent=44 // loop_footer_branch
      %46 = sbr.rel target = $region47
    $region52: #{attn_decoder_forward.1} parent=44 // loop_exit
      _
  $region45: #{attn_decoder_forward.1} parent=0 // pred_fallthru
    _
  // Predicated region
  $region64: #{attn_decoder_forward.1} parent=0 // pred_check
    _
  $region65: #{attn_decoder_forward.1} parent=0 // pred_check_branch
    %72 = sbr.rel (0) target = $region67
  $region66: #{attn_decoder_forward.1} parent=0 // pred_region
    %73 = vsyncadd [#allocation3], 16
  $region67: #{attn_decoder_forward.1} parent=0 // pred_fallthru
    _
  %s74 = smul.u32 1, 1
  %s75 = sshll.u32 %s74, 4
  %76 = dma.done [#allocation3], %s75
  %v77 = vld [vmem:[#allocation2] sm:$0x1]
  %v78 = vld [vmem:[%s2] sm:$0x1]
  %v79 = vld [vmem:[%s9] sm:$0x1]
  %v80 = vld [vmem:[%s9 + $0x1] sm:$0x1]
  %v81 = vld [vmem:[%s9 + $0x2] sm:$0x1]
  %v82 = vld [vmem:[%s9 + $0x3] sm:$0x1]
  %v83 = vld [vmem:[%s9 + $0x4] sm:$0x1]
  %v85 = vperm.slane %v78, 0
  %86 = vrot.lane.b32.xlu0 %v85, 32
  %v87 = vpop.permute.xlu0 %86
  %vm89 = vcmask 261120
  %v90 = vsel %vm89, %v77, %v87
  %v91 = vld [vmem:[%s4] sm:$0xff]
  %v92 = vld [vmem:[%s4 + $0x8] sm:$0xff]
  %v93 = vld [vmem:[%s4 + $0x10] sm:$0xff]
  %v94 = vld [vmem:[%s4 + $0x18] sm:$0xff]
  %v95 = vld [vmem:[%s4 + $0x20] sm:$0xff]
  %v96 = vld [vmem:[%s4 + $0x28] sm:$0xff]
  %v97 = vld [vmem:[%s4 + $0x30] sm:$0xff]
  %v98 = vld [vmem:[%s4 + $0x38] sm:$0xff]
  %vm99 = vcmask 523264
  %v101 = vsel %vm99, %v90, 0
  %103 = vmatpush.msra.mxu0 0.0
  %104 = vmatpush.msra.mxu0 0.0
  %105 = vmatpush.msra.mxu0 0.0
  %106 = vmatpush.msra.mxu0 0.0
  %107 = vmatpush.msra.mxu0 0.0
  %108 = vmatpush.msra.mxu0 0.0
  %109 = vmatpush.msra.mxu0 0.0
  %110 = vmatpush.msra.mxu0 0.0
  %111 = vmatpush.msra.mxu0 %v98
  %112 = vmatpush.msra.mxu0 %v97
  %113 = vmatpush.msra.mxu0 %v96
  %114 = vmatpush.msra.mxu0 %v95
  %115 = vmatpush.msra.mxu0 %v94
  %116 = vmatpush.msra.mxu0 %v93
  %117 = vmatpush.msra.mxu0 %v92
  %118 = vmatpush.msra.mxu0 %v91
  %119 = vmatmul.f32.gmra.mxu0 %v101
  %v120 = vpop.f32.mrf.mxu0
  %v121 = vadd.f32 %v79, %v120
  %122 = vdwg.mxu0
  %vm123 = vcmask 57344
  %v124 = vsel %vm123, %v121, -inf
  %125 = vmax.xlane.f32.xlu0 %v124
  %v126 = vpop.xlane.xlu0 %125
  %v127 = vsub.f32 %v121, %v126
  %v128 = vmul.f32 %v127, 1.442695
  %v129 = vpow.pop %v128
  %v130 = vsel %vm123, %v129, 0.0
  %131 = vadd.xlane.f32.xlu0 %v130
  %v132 = vpop.xlane.xlu0 %131
  %v133 = vrcp.pop %v132
  %v134 = vmul.f32 %v129, %v133
  %v135 = vld [vmem:[%s3] sm:$0xff]
  %vm136 = vcmask 64512
  %v138 = vsel %vm136, %v134, 0
  %140 = vmatpush.msra.mxu0 0.0
  %141 = vmatpush.msra.mxu0 0.0
  %142 = vmatpush.msra.mxu0 0.0
  %143 = vmatpush.msra.mxu0 0.0
  %144 = vmatpush.msra.mxu0 0.0
  %145 = vmatpush.msra.mxu0 0.0
  %146 = vmatpush.msra.mxu0 0.0
  %147 = vmatpush.msra.mxu0 0.0
  %148 = vmatpush.msra.mxu0 0.0
  %149 = vmatpush.msra.mxu0 0.0
  %150 = vmatpush.msra.mxu0 0.0
  %151 = vmatpush.msra.mxu0 0.0
  %152 = vmatpush.msra.mxu0 0.0
  %153 = vmatpush.msra.mxu0 0.0
  %154 = vmatpush.msra.mxu0 0.0
  %155 = vmatpush.msra.mxu0 %v135
  %156 = vmatmul.f32.gmra.mxu0 %v138
  %v157 = vpop.f32.mrf.mxu0
  %v158 = vadd.f32 0.0, %v157
  %159 = vdwg.mxu0
  %161 = vrot.lane.b32.xlu0 %v158, 32
  %v162 = vpop.permute.xlu0 %161
  %v164 = vsel %vm89, %v77, %v162
  %v165 = vld [vmem:[%s5] sm:$0xff]
  %v166 = vld [vmem:[%s5 + $0x8] sm:$0xff]
  %v167 = vld [vmem:[%s5 + $0x10] sm:$0xff]
  %v168 = vld [vmem:[%s5 + $0x18] sm:$0xff]
  %v169 = vld [vmem:[%s5 + $0x20] sm:$0xff]
  %v170 = vld [vmem:[%s5 + $0x28] sm:$0xff]
  %v171 = vld [vmem:[%s5 + $0x30] sm:$0xff]
  %v172 = vld [vmem:[%s5 + $0x38] sm:$0xff]
  %v174 = vsel %vm99, %v164, 0
  %176 = vmatpush.msra.mxu0 0.0
  %177 = vmatpush.msra.mxu0 0.0
  %178 = vmatpush.msra.mxu0 0.0
  %179 = vmatpush.msra.mxu0 0.0
  %180 = vmatpush.msra.mxu0 0.0
  %181 = vmatpush.msra.mxu0 0.0
  %182 = vmatpush.msra.mxu0 0.0
  %183 = vmatpush.msra.mxu0 0.0
  %184 = vmatpush.msra.mxu0 %v172
  %185 = vmatpush.msra.mxu0 %v171
  %186 = vmatpush.msra.mxu0 %v170
  %187 = vmatpush.msra.mxu0 %v169
  %188 = vmatpush.msra.mxu0 %v168
  %189 = vmatpush.msra.mxu0 %v167
  %190 = vmatpush.msra.mxu0 %v166
  %191 = vmatpush.msra.mxu0 %v165
  %192 = vmatmul.f32.gmra.mxu0 %v174
  %v193 = vpop.f32.mrf.mxu0
  %v194 = vadd.f32 %v80, %v193
  %195 = vdwg.mxu0
  %v196 = vmax.f32 %v194, 0.0
  %v197 = vld [vmem:[%s6] sm:$0xff]
  %v198 = vld [vmem:[%s6 + $0x8] sm:$0xff]
  %v199 = vld [vmem:[%s6 + $0x10] sm:$0xff]
  %v200 = vld [vmem:[%s6 + $0x18] sm:$0xff]
  %v202 = vsel %vm89, %v196, 0
  %204 = vmatpush.msra.mxu0 0.0
  %205 = vmatpush.msra.mxu0 0.0
  %206 = vmatpush.msra.mxu0 0.0
  %207 = vmatpush.msra.mxu0 0.0
  %208 = vmatpush.msra.mxu0 0.0
  %209 = vmatpush.msra.mxu0 0.0
  %210 = vmatpush.msra.mxu0 0.0
  %211 = vmatpush.msra.mxu0 0.0
  %212 = vmatpush.msra.mxu0 0.0
  %213 = vmatpush.msra.mxu0 0.0
  %214 = vmatpush.msra.mxu0 0.0
  %215 = vmatpush.msra.mxu0 0.0
  %216 = vmatpush.msra.mxu0 %v200
  %217 = vmatpush.msra.mxu0 %v199
  %218 = vmatpush.msra.mxu0 %v198
  %219 = vmatpush.msra.mxu0 %v197
  %220 = vmatmul.f32.gmra.mxu0 %v202
  %v221 = vpop.f32.mrf.mxu0
  %v222 = vadd.f32 %v81, %v221
  %223 = vdwg.mxu0
  %v224 = vld [vmem:[%s7] sm:$0xff]
  %v225 = vld [vmem:[%s7 + $0x8] sm:$0xff]
  %v226 = vld [vmem:[%s7 + $0x10] sm:$0xff]
  %v227 = vld [vmem:[%s7 + $0x18] sm:$0xff]
  %v228 = vsel %vm89, %v78, 0
  %230 = vmatpush.msra.mxu0 0.0
  %231 = vmatpush.msra.mxu0 0.0
  %232 = vmatpush.msra.mxu0 0.0
  %233 = vmatpush.msra.mxu0 0.0
  %234 = vmatpush.msra.mxu0 0.0
  %235 = vmatpush.msra.mxu0 0.0
  %236 = vmatpush.msra.mxu0 0.0
  %237 = vmatpush.msra.mxu0 0.0
  %238 = vmatpush.msra.mxu0 0.0
  %239 = vmatpush.msra.mxu0 0.0
  %240 = vmatpush.msra.mxu0 0.0
  %241 = vmatpush.msra.mxu0 0.0
  %242 = vmatpush.msra.mxu0 %v227
  %243 = vmatpush.msra.mxu0 %v226
  %244 = vmatpush.msra.mxu0 %v225
  %245 = vmatpush.msra.mxu0 %v224
  %246 = vmatmul.f32.gmra.mxu0 %v228
  %v247 = vpop.f32.mrf.mxu0
  %v248 = vadd.f32 %v82, %v247
  %249 = vdwg.mxu0
  %v250 = vadd.f32 %v222, %v248
  %v251 = vxor.u32 %v250, 2147483648
  %v252 = vmul.f32 %v251, 1.442695
  %v253 = vpow.pop %v252
  %v254 = vadd.f32 %v253, 1.0
  %v255 = vrcp.pop %v254
  %v256 = vmul.f32 %v254, %v255
  %v257 = vsub.f32 1.0, %v256
  %v258 = vmul.f32 %v255, %v257
  %v259 = vadd.f32 %v255, %v258
  %vm260 = vweird.f32 %v254
  %vm261 = vweird.f32 %v255
  %vm262 = vmor %vm260, %vm261
  %v263 = vsel %vm262, %v255, %v259
  %v264 = vand.u32 2147483647, %v254
  %vm265 = vcmp.eq.f32.partialorder %v264, 8.507059e+37
  %v266 = vand.u32 %v254, 2147483648
  %v267 = vor.u32 1.1754944e-38, %v266
  %v268 = vsel %vm265, %v267, %v263
  %v269 = vmul.f32 1.0, %v268
  %271 = vrot.lane.b32.xlu0 %v248, 64
  %v272 = vpop.permute.xlu0 %271
  %v274 = vmul.f32 %v269, %v272
  %276 = vrot.lane.b32.xlu0 %v274, 64
  %v277 = vpop.permute.xlu0 %276
  %v279 = vadd.f32 %v222, %v277
  %v280 = vtanh.pop %v279
  %v281 = vsub.f32 1.0, %v269
  %283 = vrot.lane.b32.xlu0 %v280, 96
  %v284 = vpop.permute.xlu0 %283
  %v286 = vmul.f32 %v281, %v284
  %v287 = vmul.f32 %v269, %v87
  %v288 = vadd.f32 %v286, %v287
  %v289 = vld [vmem:[%s8] sm:$0xff]
  %v290 = vld [vmem:[%s8 + $0x8] sm:$0xff]
  %v291 = vld [vmem:[%s8 + $0x10] sm:$0xff]
  %v292 = vld [vmem:[%s8 + $0x18] sm:$0xff]
  %294 = vrot.lane.b32.xlu0 %v288, 96
  %v295 = vpop.permute.xlu0 %294
  %v296 = vsel %vm89, %v295, 0
  %298 = vmatpush.msra.mxu0 0.0
  %299 = vmatpush.msra.mxu0 0.0
  %300 = vmatpush.msra.mxu0 0.0
  %301 = vmatpush.msra.mxu0 0.0
  %302 = vmatpush.msra.mxu0 0.0
  %303 = vmatpush.msra.mxu0 0.0
  %304 = vmatpush.msra.mxu0 0.0
  %305 = vmatpush.msra.mxu0 0.0
  %306 = vmatpush.msra.mxu0 0.0
  %307 = vmatpush.msra.mxu0 0.0
  %308 = vmatpush.msra.mxu0 0.0
  %309 = vmatpush.msra.mxu0 0.0
  %310 = vmatpush.msra.mxu0 %v292
  %311 = vmatpush.msra.mxu0 %v291
  %312 = vmatpush.msra.mxu0 %v290
  %313 = vmatpush.msra.mxu0 %v289
  %314 = vmatmul.f32.gmra.mxu0 %v296
  %v315 = vpop.f32.mrf.mxu0
  %v316 = vadd.f32 %v83, %v315
  %317 = vdwg.mxu0
  %vm318 = vcmask 122880
  %v319 = vsel %vm318, %v316, -inf
  %320 = vmax.xlane.f32.xlu0 %v319
  %v321 = vpop.xlane.xlu0 %320
  %v322 = vsub.f32 %v316, %v321
  %v323 = vmul.f32 %v322, 1.442695
  %v324 = vpow.pop %v323
  %v325 = vsel %vm318, %v324, 0.0
  %326 = vadd.xlane.f32.xlu0 %v325
  %v327 = vpop.xlane.xlu0 %326
  %v328 = vlog2.pop %v327
  %v329 = vmul.f32 %v328, 0.6931472
  %v330 = vsub.f32 %v322, %v329
  %331 = vst [vmem:[%s10] sm:$0x7] 0.0
  %332 = vst.msk [vmem:[%s10] sm:$0x1] %vm318, %v330
  %vm334 = vcmask 253952
  %335 = vst.msk [vmem:[%s10 + $0x1] sm:$0x1] %vm334, %v295
  %336 = vst.msk [vmem:[%s10 + $0x2] sm:$0x1] %vm123, %v134
  // Predicated region
  $region68: #{attn_decoder_forward.1} parent=0 // pred_check
    _
  $region69: #{attn_decoder_forward.1} parent=0 // pred_check_branch
    %338 = sbr.rel (0) target = $region71
  $region70: #{attn_decoder_forward.1} parent=0 // pred_region
    _
  $region71: #{attn_decoder_forward.1} parent=0 // pred_fallthru
    _
  // Predicated region
  $region72: #{attn_decoder_forward.1} parent=0 // pred_check
    _
  $region73: #{attn_decoder_forward.1} parent=0 // pred_check_branch
    %340 = sbr.rel (0) target = $region75
  $region74: #{attn_decoder_forward.1} parent=0 // pred_region
    _
  $region75: #{attn_decoder_forward.1} parent=0 // pred_fallthru
    _
  %341 = vsyncmov [#allocation3]
  %s342 = vpop.sfrf %341
  %p343 = scmp.eq.s32.totalorder %s342, 0
  %p344 = pneg %p343
  %346 = shalt.err (%p344)

</llo_original>
